<compile_context>
chip_gen: v5e
topology: v5e:2x2
jax: 0.10.0
libtpu: 0.0.40
codegen_flags: <defaults>
</compile_context>

<pallas_src>
import math
import functools

import jax
import jax.numpy as jnp
from jax.experimental import pallas as pl
from jax.experimental.pallas import tpu as pltpu


def _round_up(x, m):
    return (x + m - 1) // m * m


def _spatial_embeddings_kernel(x_ref, w1_ref, w2_ref, vec_ref, out_ref,
                               *, eps: float, d_real: int):
    # x_ref : (TM, IN)     x tile, native dtype (f32 or bf16), native width
    # w1_ref: (IN, D_P)    bf16 (output dim zero-padded to 128 multiple)
    # w2_ref: (D_P, D_P)   bf16 (zero-padded)
    # vec_ref: (4, D_P) f32 = [b1, b2, gamma*sqrt(D), beta*sqrt(D)] (zero-padded)
    # out_ref: (TM, D)     real (unpadded) embedding width
    x = x_ref[...]
    if x.dtype != jnp.bfloat16:
        x = x.astype(jnp.bfloat16)          # cast on VPU; stream stays 1 HBM pass

    b1 = vec_ref[0:1, :]
    b2 = vec_ref[1:2, :]
    gamma = vec_ref[2:3, :]
    beta = vec_ref[3:4, :]

    # Linear(input -> D) + ReLU   (bf16 MXU inputs, f32 accumulate)
    h = jnp.dot(x, w1_ref[...], preferred_element_type=jnp.float32) + b1
    h = jnp.maximum(h, 0.0)

    # Linear(D -> D)
    y = jnp.dot(h.astype(w2_ref.dtype), w2_ref[...],
                preferred_element_type=jnp.float32) + b2

    # One-pass LayerNorm over the d_real real features. Padded lanes of y are
    # exact zeros (zero-padded weights/biases), so sum(y) and sum(y*y) already
    # equal the real-lane sums; no feature mask is needed.
    inv_d = 1.0 / float(d_real)
    mean = jnp.sum(y, axis=-1, keepdims=True) * inv_d
    ex2 = jnp.sum(y * y, axis=-1, keepdims=True) * inv_d
    var = jnp.maximum(ex2 - mean * mean, 0.0)   # guard one-pass cancellation
    y = (y - mean) * jax.lax.rsqrt(var + eps)

    # Affine with the sqrt(D) transformer scale pre-folded into gamma/beta,
    # then ReLU. Padded lanes stay 0 (gamma/beta padded with zeros) and are
    # sliced away at the store when D is not lane-aligned.
    y = jnp.maximum(y * gamma + beta, 0.0)
    d_out = out_ref.shape[-1]
    out_ref[...] = y[:, :d_out].astype(out_ref.dtype)


def pack_params(params, *, scale_factor=None, weight_dtype=jnp.bfloat16):
    """One-time (hoist out of the per-call path) parameter padding/packing."""
    in_size, emb_dim = params["w1"].shape
    if scale_factor is None:
        scale_factor = math.sqrt(emb_dim)
    scale_factor = float(scale_factor)
    d_pad = _round_up(emb_dim, 128)

    w1 = jnp.zeros((in_size, d_pad), weight_dtype)
    w1 = w1.at[:, :emb_dim].set(params["w1"].astype(weight_dtype))
    w2 = jnp.zeros((d_pad, d_pad), weight_dtype)
    w2 = w2.at[:emb_dim, :emb_dim].set(params["w2"].astype(weight_dtype))

    vecs = jnp.zeros((4, d_pad), jnp.float32)
    vecs = vecs.at[0, :emb_dim].set(params["b1"].astype(jnp.float32))
    vecs = vecs.at[1, :emb_dim].set(params["b2"].astype(jnp.float32))
    vecs = vecs.at[2, :emb_dim].set(params["gamma"].astype(jnp.float32) * scale_factor)
    vecs = vecs.at[3, :emb_dim].set(params["beta"].astype(jnp.float32) * scale_factor)

    return {"w1": w1, "w2": w2, "vecs": vecs,
            "in_size": int(in_size), "emb_dim": int(emb_dim), "d_pad": int(d_pad)}


def spatial_embeddings(x, mask, params, *, eps=1e-5, scale_factor=None,
                       row_tile=None, out_dtype=None):
    """Eval-mode SpatialEmbeddings forward.

    x: (B, T, input_size), mask: (B, T, 1). The mask is unused because
    eval-mode MaskedNorm('layer') ignores it. `params` may be either raw
    parameters (see init_params) or the output of pack_params() — pass the
    packed form when calling repeatedly to avoid re-padding the weights.
    """
    # TODO(synk): training-mode MaskedNorm (masked_select/masked_scatter over
    # valid frames) is data-dependent compaction and is not implemented here.
    del mask
    if "vecs" not in params:
        params = pack_params(params, scale_factor=scale_factor)

    B, T, in_size = x.shape
    assert in_size == params["in_size"], "input_size mismatch with packed params"
    D = params["emb_dim"]
    d_pad = params["d_pad"]
    rows = B * T
    if out_dtype is None:
        out_dtype = x.dtype           # pass jnp.bfloat16 to halve writeback bytes

    x_itemsize = jnp.dtype(x.dtype).itemsize
    out_itemsize = jnp.dtype(out_dtype).itemsize

    # ---- generation-aware VMEM budgets ---------------------------------------
    try:
        vmem_cap = int(pltpu.get_tpu_info().vmem_capacity_bytes)
    except Exception:  # e.g. interpret mode / unknown device
        vmem_cap = 128 << 20
    tile_budget = (vmem_cap * 3) // 4          # ~48 MiB on v7x, ~96 MiB on v5e/v6e
    limit_cap = vmem_cap - (8 << 20)           # never request more than physical

    weight_bytes = (in_size * d_pad + d_pad * d_pad) * 2   # bf16

    def _vmem_est(rt, x_bufs):
        return (x_bufs * rt * in_size * x_itemsize          # x tiles (pipelined)
                + 2 * rt * D * out_itemsize                 # out tiles (2-buf)
                + 2 * weight_bytes                          # weights (conservative 2x)
                + 2 * 8 * d_pad * 4                         # bias/affine slab
                + 3 * rt * d_pad * 4)                       # f32 intermediates h/y/tmp

    # ---- row tile selection ---------------------------------------------------
    if row_tile is None:
        row_tile = 1024 if (vmem_cap >= (96 << 20) and weight_bytes < (8 << 20)) else 512
    row_tile = int(row_tile)
    # Keep both v7x TensorCores busy: at least 2 grid steps whenever rows allow.
    row_tile = min(row_tile, _round_up(max(8, (rows + 1) // 2), 8))
    # MXU-friendly alignment: 256-multiples for large tiles, 8-sublane otherwise.
    if row_tile >= 256:
        row_tile = max(256, (row_tile // 256) * 256)
    row_tile = max(8, _round_up(row_tile, 8))
    # Shrink to fit the generation-aware VMEM budget.
    while row_tile > 64 and _vmem_est(row_tile, 2) > tile_budget:
        row_tile //= 2

    # Extra x pipelining only for small-D (short per-step MXU work) if it fits.
    x_bufs = 3 if (d_pad <= 256 and _vmem_est(row_tile, 3) <= tile_budget) else 2
    est = _vmem_est(row_tile, x_bufs)
    vmem_limit = int(min(limit_cap, max(est + (4 << 20), 32 << 20)))

    grid_steps = pl.cdiv(rows, row_tile)

    # x: just flatten (no pad, no cast, no extra HBM round-trip).
    x2d = x.reshape(rows, in_size)

    kernel = functools.partial(_spatial_embeddings_kernel, eps=float(eps), d_real=D)
    compiler_params = pltpu.CompilerParams(
        dimension_semantics=("parallel",),
        vmem_limit_bytes=vmem_limit)

    def _in_specs(with_hints):
        if with_hints:
            return [
                pl.BlockSpec((row_tile, in_size), lambda i: (i, 0),
                             pipeline_mode=pl.Buffered(x_bufs)),
                # constant index_map -> single resident buffer is enough
                pl.BlockSpec((in_size, d_pad), lambda i: (0, 0),
                             pipeline_mode=pl.Buffered(1)),
                pl.BlockSpec((d_pad, d_pad), lambda i: (0, 0),
                             pipeline_mode=pl.Buffered(1)),
                pl.BlockSpec((4, d_pad), lambda i: (0, 0),
                             pipeline_mode=pl.Buffered(1)),
            ]
        return [
            pl.BlockSpec((row_tile, in_size), lambda i: (i, 0)),
            pl.BlockSpec((in_size, d_pad), lambda i: (0, 0)),
            pl.BlockSpec((d_pad, d_pad), lambda i: (0, 0)),
            pl.BlockSpec((4, d_pad), lambda i: (0, 0)),
        ]

    def _run(with_hints):
        out = pl.pallas_call(
            kernel,
            out_shape=jax.ShapeDtypeStruct((rows, D), out_dtype),
            grid=(grid_steps,),
            in_specs=_in_specs(with_hints),
            out_specs=pl.BlockSpec((row_tile, D), lambda i: (i, 0)),
            compiler_params=compiler_params,
        )(x2d, params["w1"], params["w2"], params["vecs"])
        return jax.block_until_ready(out)

    try:
        out2d = _run(True)
    except Exception:
        # Pipeline-mode hints not supported on this Pallas build: plain specs.
        out2d = _run(False)

    return out2d.reshape(B, T, D)


def init_params(key, input_size, embedding_dim):
    """Deterministic synthetic parameters (PyTorch Linear shapes, stored transposed)."""
    k1, k2, k3, k4 = jax.random.split(key, 4)
    bound1 = 1.0 / math.sqrt(input_size)
    bound2 = 1.0 / math.sqrt(embedding_dim)
    return {
        # stored as (in, out) == W.T of torch's (out, in)
        "w1": jax.random.uniform(k1, (input_size, embedding_dim),
                                 jnp.float32, -bound1, bound1),
        "b1": jax.random.uniform(k2, (embedding_dim,), jnp.float32, -bound1, bound1),
        "w2": jax.random.uniform(k3, (embedding_dim, embedding_dim),
                                 jnp.float32, -bound2, bound2),
        "b2": jax.random.uniform(k4, (embedding_dim,), jnp.float32, -bound2, bound2),
        # LayerNorm affine params (PyTorch init: ones / zeros)
        "gamma": jnp.ones((embedding_dim,), jnp.float32),
        "beta": jnp.zeros((embedding_dim,), jnp.float32),
    }


def _reference(x, params, eps=1e-5, scale_factor=None):
    """Same math as the PyTorch eval forward, with the kernel's bf16 matmul inputs."""
    D = params["w1"].shape[1]
    if scale_factor is None:
        scale_factor = math.sqrt(D)
    xb = x.astype(jnp.bfloat16)
    w1 = params["w1"].astype(jnp.bfloat16)
    w2 = params["w2"].astype(jnp.bfloat16)
    h = jnp.maximum(jnp.dot(xb, w1, preferred_element_type=jnp.float32)
                    + params["b1"], 0.0)
    y = jnp.dot(h.astype(jnp.bfloat16), w2, preferred_element_type=jnp.float32) \
        + params["b2"]
    mean = jnp.mean(y, axis=-1, keepdims=True)
    var = jnp.mean((y - mean) ** 2, axis=-1, keepdims=True)
    y = (y - mean) / jnp.sqrt(var + eps) * params["gamma"] + params["beta"]
    return jnp.maximum(y, 0.0) * scale_factor


if __name__ == "__main__":
    B, T, INPUT_SIZE, EMB_DIM = 2, 8, 16, 32

    key = jax.random.PRNGKey(0)
    kx, kp = jax.random.split(key)
    x = jax.random.normal(kx, (B, T, INPUT_SIZE), jnp.float32)
    mask = jnp.ones((B, T, 1), jnp.bool_)
    params = init_params(kp, INPUT_SIZE, EMB_DIM)

    # Pad/pack the parameters once, outside the per-call path.
    packed = pack_params(params)

    out = spatial_embeddings(x, mask, packed)
    out = jax.block_until_ready(out)

    ref = _reference(x, params)
    assert out.shape == (B, T, EMB_DIM)
    assert jnp.allclose(out, ref, atol=2e-2, rtol=2e-2), "mismatch vs reference"

    print("KERNEL_OK")
</pallas_src>

<mosaic_0001>
module attributes {stable_mosaic.version = 11 : i64} {
  func.func @_spatial_embeddings_kernel(%arg0: i32, %arg1: memref<8x16xf32, #tpu.memory_space<vmem>>, %arg2: memref<16x128xbf16, #tpu.memory_space<vmem>>, %arg3: memref<128x128xbf16, #tpu.memory_space<vmem>>, %arg4: memref<4x128xf32, #tpu.memory_space<vmem>>, %arg5: memref<8x32xf32, #tpu.memory_space<vmem>>) attributes {dimension_semantics = [#tpu.dimension_semantics<parallel>], iteration_bounds = array<i64: 2>, scalar_prefetch = 0 : i64, scratch_operands = 0 : i64, tpu.core_type = #tpu.core_type<tc>, window_params = [{transform_indices = @transform_0, window_bounds = array<i64: 8, 16>}, {pipeline_mode = #tpu.pipeline_mode<synchronous>, transform_indices = @transform_1, window_bounds = array<i64: 16, 128>}, {pipeline_mode = #tpu.pipeline_mode<synchronous>, transform_indices = @transform_2, window_bounds = array<i64: 128, 128>}, {pipeline_mode = #tpu.pipeline_mode<synchronous>, transform_indices = @transform_3, window_bounds = array<i64: 4, 128>}, {transform_indices = @transform_4, window_bounds = array<i64: 8, 32>}]} {
    %c0 = arith.constant 0 : index
    %c0_0 = arith.constant 0 : index
    %0 = vector.load %arg1[%c0, %c0_0] : memref<8x16xf32, #tpu.memory_space<vmem>>, vector<8x16xf32>
    %1 = arith.truncf %0 : vector<8x16xf32> to vector<8x16xbf16>
    %c0_1 = arith.constant 0 : index
    %c0_2 = arith.constant 0 : index
    %2 = vector.load %arg4[%c0_1, %c0_2] : memref<4x128xf32, #tpu.memory_space<vmem>>, vector<1x128xf32>
    %c1 = arith.constant 1 : index
    %c0_3 = arith.constant 0 : index
    %3 = vector.load %arg4[%c1, %c0_3] : memref<4x128xf32, #tpu.memory_space<vmem>>, vector<1x128xf32>
    %c2 = arith.constant 2 : index
    %c0_4 = arith.constant 0 : index
    %4 = vector.load %arg4[%c2, %c0_4] : memref<4x128xf32, #tpu.memory_space<vmem>>, vector<1x128xf32>
    %c3 = arith.constant 3 : index
    %c0_5 = arith.constant 0 : index
    %5 = vector.load %arg4[%c3, %c0_5] : memref<4x128xf32, #tpu.memory_space<vmem>>, vector<1x128xf32>
    %c0_6 = arith.constant 0 : index
    %c0_7 = arith.constant 0 : index
    %6 = vector.load %arg2[%c0_6, %c0_7] : memref<16x128xbf16, #tpu.memory_space<vmem>>, vector<16x128xbf16>
    %cst = arith.constant dense<0.000000e+00> : vector<8x128xf32>
    %7 = tpu.matmul %1, %6, %cst {dimension_numbers = #tpu.dot_dimension_numbers<[1], [0], [0], [1], [0, 0, 1, 1], [], []>} : vector<8x16xbf16>, vector<16x128xbf16>, vector<8x128xf32> -> vector<8x128xf32>
    %8 = vector.broadcast %2 : vector<1x128xf32> to vector<8x128xf32>
    %9 = arith.addf %7, %8 : vector<8x128xf32>
    %cst_8 = arith.constant 0.000000e+00 : f32
    %10 = vector.broadcast %cst_8 : f32 to vector<8x128xf32>
    %11 = arith.maximumf %9, %10 : vector<8x128xf32>
    %12 = arith.truncf %11 : vector<8x128xf32> to vector<8x128xbf16>
    %c0_9 = arith.constant 0 : index
    %c0_10 = arith.constant 0 : index
    %13 = vector.load %arg3[%c0_9, %c0_10] : memref<128x128xbf16, #tpu.memory_space<vmem>>, vector<128x128xbf16>
    %cst_11 = arith.constant dense<0.000000e+00> : vector<8x128xf32>
    %14 = tpu.matmul %12, %13, %cst_11 {dimension_numbers = #tpu.dot_dimension_numbers<[1], [0], [0], [1], [0, 0, 1, 1], [], []>} : vector<8x128xbf16>, vector<128x128xbf16>, vector<8x128xf32> -> vector<8x128xf32>
    %15 = vector.broadcast %3 : vector<1x128xf32> to vector<8x128xf32>
    %16 = arith.addf %14, %15 : vector<8x128xf32>
    %cst_12 = arith.constant dense<0.000000e+00> : vector<8xf32>
    %17 = vector.multi_reduction <add>, %16, %cst_12 [1] : vector<8x128xf32> to vector<8xf32>
    %18 = vector.shape_cast %17 : vector<8xf32> to vector<8x1xf32>
    %cst_13 = arith.constant 3.125000e-02 : f32
    %19 = vector.broadcast %cst_13 : f32 to vector<8x1xf32>
    %20 = arith.mulf %18, %19 : vector<8x1xf32>
    %21 = arith.mulf %16, %16 : vector<8x128xf32>
    %cst_14 = arith.constant dense<0.000000e+00> : vector<8xf32>
    %22 = vector.multi_reduction <add>, %21, %cst_14 [1] : vector<8x128xf32> to vector<8xf32>
    %23 = vector.shape_cast %22 : vector<8xf32> to vector<8x1xf32>
    %cst_15 = arith.constant 3.125000e-02 : f32
    %24 = vector.broadcast %cst_15 : f32 to vector<8x1xf32>
    %25 = arith.mulf %23, %24 : vector<8x1xf32>
    %26 = arith.mulf %20, %20 : vector<8x1xf32>
    %27 = arith.subf %25, %26 : vector<8x1xf32>
    %cst_16 = arith.constant 0.000000e+00 : f32
    %28 = vector.broadcast %cst_16 : f32 to vector<8x1xf32>
    %29 = arith.maximumf %27, %28 : vector<8x1xf32>
    %30 = vector.broadcast %20 : vector<8x1xf32> to vector<8x128xf32>
    %31 = arith.subf %16, %30 : vector<8x128xf32>
    %cst_17 = arith.constant 9.99999974E-6 : f32
    %32 = vector.broadcast %cst_17 : f32 to vector<8x1xf32>
    %33 = arith.addf %29, %32 : vector<8x1xf32>
    %34 = math.rsqrt %33 : vector<8x1xf32>
    %35 = vector.broadcast %34 : vector<8x1xf32> to vector<8x128xf32>
    %36 = arith.mulf %31, %35 : vector<8x128xf32>
    %37 = vector.broadcast %4 : vector<1x128xf32> to vector<8x128xf32>
    %38 = arith.mulf %36, %37 : vector<8x128xf32>
    %39 = vector.broadcast %5 : vector<1x128xf32> to vector<8x128xf32>
    %40 = arith.addf %38, %39 : vector<8x128xf32>
    %cst_18 = arith.constant 0.000000e+00 : f32
    %41 = vector.broadcast %cst_18 : f32 to vector<8x128xf32>
    %42 = arith.maximumf %40, %41 : vector<8x128xf32>
    %43 = vector.extract_strided_slice %42 {offsets = [0, 0], sizes = [8, 32], strides = [1, 1]} : vector<8x128xf32> to vector<8x32xf32>
    %c0_19 = arith.constant 0 : index
    %c0_20 = arith.constant 0 : index
    %44 = vector.load %arg5[%c0_19, %c0_20] : memref<8x32xf32, #tpu.memory_space<vmem>>, vector<8x32xf32>
    tpu.vector_store %arg5[%c0_19, %c0_20], %43 {strides = array<i32>} : memref<8x32xf32, #tpu.memory_space<vmem>>, vector<8x32xf32>,
    return
  }
  func.func @transform_0(%arg0: i32) -> (i32, i32) {
    %c0_i32 = arith.constant 0 : i32
    %c0_i32_0 = arith.constant 0 : i32
    return %arg0, %c0_i32 : i32, i32
  }
  func.func @transform_1(%arg0: i32) -> (i32, i32) {
    %c0_i32 = arith.constant 0 : i32
    %c0_i32_0 = arith.constant 0 : i32
    %c0_i32_1 = arith.constant 0 : i32
    return %c0_i32, %c0_i32_0 : i32, i32
  }
  func.func @transform_2(%arg0: i32) -> (i32, i32) {
    %c0_i32 = arith.constant 0 : i32
    %c0_i32_0 = arith.constant 0 : i32
    %c0_i32_1 = arith.constant 0 : i32
    return %c0_i32, %c0_i32_0 : i32, i32
  }
  func.func @transform_3(%arg0: i32) -> (i32, i32) {
    %c0_i32 = arith.constant 0 : i32
    %c0_i32_0 = arith.constant 0 : i32
    %c0_i32_1 = arith.constant 0 : i32
    return %c0_i32, %c0_i32_0 : i32, i32
  }
  func.func @transform_4(%arg0: i32) -> (i32, i32) {
    %c0_i32 = arith.constant 0 : i32
    %c0_i32_0 = arith.constant 0 : i32
    return %arg0, %c0_i32 : i32, i32
  }
}

</mosaic_0001>

<llo_original>
// kernel: tpu_custom_call.1
$region0: #{tpu_custom_call.1}
  #allocation0 [shape = 'u32[]', space=smem, size = 0x4, offset = 0x4, fixed_abs, tag = 'smem constant byte address 0x4 - core index']
  #allocation1 [shape = 'u32[72,128]{1,0:T(1,128)}', space=vmem, size = 0x9000, scoped, tag = 'internal scratch']
  %s0 = inlined_call_operand.hbm [shape: f32[16,16], index: 0, kind: input, shape index: {}]
  %s1 = inlined_call_operand.hbm [shape: bf16[16,128], index: 1, kind: input, shape index: {}]
  %s2 = inlined_call_operand.hbm [shape: bf16[128,128], index: 2, kind: input, shape index: {}]
  %s3 = inlined_call_operand.hbm [shape: f32[4,128], index: 3, kind: input, shape index: {}]
  %s4 = inlined_call_operand.hbm [shape: f32[16,32], index: 4, kind: output, shape index: {}]
  %s5 = sld [smem:[#allocation0]]
  $region65: #{tpu_custom_call.1} parent=0
    _
  %s7 = ssub.s32 1, %s5
  %s8 = scalar_select 0, %s7, %s5
  $region1: #{tpu_custom_call.1} parent=0
    #allocation2 [shape = 'u8[8192]{0}', space=vmem, size = 0x2000, scoped, tag = 'input window, operand 0']
    #allocation3 [shape = 's32[2]{0}', space=sflag, size = 0x8, scoped, tag = 'scoped memory for tpu_custom_call.1']
    #allocation4 [shape = 's32[2]{0}', space=sflag, size = 0x8, scoped, tag = 'scoped memory for tpu_custom_call.1']
    #allocation5 [shape = 'u8[4096]{0}', space=vmem, size = 0x1000, scoped, tag = 'input window, operand 1, single buffered']
    #allocation6 [shape = 's32[1]{0}', space=sflag, size = 0x4, scoped, tag = 'scoped memory for tpu_custom_call.1']
    #allocation7 [shape = 'u8[32768]{0}', space=vmem, size = 0x8000, scoped, tag = 'input window, operand 2, single buffered']
    #allocation8 [shape = 'u8[2048]{0}', space=vmem, size = 0x800, scoped, tag = 'input window, operand 3, single buffered']
    #allocation9 [shape = 's32[1]{0}', space=sflag, size = 0x4, scoped, tag = 'scoped memory for tpu_custom_call.1']
    #allocation10 [shape = 'u8[8192]{0}', space=vmem, size = 0x2000, scoped, tag = 'output window, operand 0']
    %9 = vsyncpa [#allocation3], 0
    %s10 = scalar_lea.sflag [#allocation3], 1
    %11 = vsyncpa %s10, 0
    %12 = vsyncpa [#allocation6], 0
    %13 = vsyncpa [#allocation9], 0
    %14 = vsyncpa [#allocation4], 0
    %s15 = scalar_lea.sflag [#allocation4], 1
    %16 = vsyncpa %s15, 0
    loop: start=0, step=1, limit=4
    $region2: #{tpu_custom_call.1} parent=1 // loop_pre_header
      _
    $region3: #{tpu_custom_call.1} parent=1 // loop_header
      %s18 = sphi 0, %s22
      %p19 = scmp.ge.s32.totalorder %s18, 4
      %s28 = sphi 0, %s30
      %s31 = sphi 0, %s28
      %s32 = sphi 0, %s31
      %s48 = sphi 0, %s32
      %s52 = sphi 0, %s52
      %s54 = sphi 0, %s52
      %s55 = sphi 0, %s54
      %s69 = sphi 0, %s55
      %s73 = sphi 0, %s73
      %s75 = sphi 0, %s73
      %s76 = sphi 0, %s75
      %s90 = sphi 0, %s76
      %s94 = sphi 0, %s94
      %s96 = sphi 0, %s94
      %s97 = sphi 0, %s96
      %s111 = sphi 0, %s97
      %s117 = sphi 0, %s119
      %s120 = sphi 0, %s117
      %s121 = sphi 0, %s120
      %s137 = sphi 0, %s121
    $region4: #{tpu_custom_call.1} parent=1 // loop_header_branch
      %21 = sbr.rel (%p19) target = $region8
    $region5: #{tpu_custom_call.1} parent=1 // loop_body
      %s23 = ssub.s32 %s18, 1
      %s24 = ssub.s32 %s18, 2
      %s25 = sadd.s32 %s18, 1
      %s26 = ssub.s32 %s18, %s25
      %p27 = scmp.eq.s32.totalorder %s26, 0
      %s29 = sadd.s32 %s28, 1
      %s30 = scalar_select %p27, %s28, %s29
      %p33 = pneg %p27
      %p34 = scmp.eq.s32.totalorder %s18, 1
      %p35 = por %p33, %p34
      %p36 = scmp.ne.s32.totalorder %s28, %s31
      %p37 = scmp.eq.s32.totalorder %s18, 0
      %p38 = por %p36, %p37
      %p39 = scmp.ne.s32.totalorder %s28, %s31
      %p40 = scmp.eq.s32.totalorder %s23, 1
      %p41 = por %p39, %p40
      %p42 = scmp.ne.s32.totalorder %s31, %s32
      %p43 = scmp.eq.s32.totalorder %s23, 0
      %p44 = por %p42, %p43
      %p45 = scmp.ne.s32.totalorder %s31, %s32
      %p46 = scmp.eq.s32.totalorder %s24, 1
      %p47 = por %p45, %p46
      %p49 = scmp.ne.s32.totalorder %s32, %s48
      %p50 = scmp.eq.s32.totalorder %s24, 0
      %p51 = por %p49, %p50
      %s53 = sadd.s32 %s52, 1
      %p56 = scmp.eq.s32.totalorder %s18, 1
      %p57 = scmp.ne.s32.totalorder %s52, %s54
      %p58 = scmp.eq.s32.totalorder %s18, 0
      %p59 = por %p57, %p58
      %p60 = scmp.ne.s32.totalorder %s52, %s54
      %p61 = scmp.eq.s32.totalorder %s23, 1
      %p62 = por %p60, %p61
      %p63 = scmp.ne.s32.totalorder %s54, %s55
      %p64 = scmp.eq.s32.totalorder %s23, 0
      %p65 = por %p63, %p64
      %p66 = scmp.ne.s32.totalorder %s54, %s55
      %p67 = scmp.eq.s32.totalorder %s24, 1
      %p68 = por %p66, %p67
      %p70 = scmp.ne.s32.totalorder %s55, %s69
      %p71 = scmp.eq.s32.totalorder %s24, 0
      %p72 = por %p70, %p71
      %s74 = sadd.s32 %s73, 1
      %p77 = scmp.eq.s32.totalorder %s18, 1
      %p78 = scmp.ne.s32.totalorder %s73, %s75
      %p79 = scmp.eq.s32.totalorder %s18, 0
      %p80 = por %p78, %p79
      %p81 = scmp.ne.s32.totalorder %s73, %s75
      %p82 = scmp.eq.s32.totalorder %s23, 1
      %p83 = por %p81, %p82
      %p84 = scmp.ne.s32.totalorder %s75, %s76
      %p85 = scmp.eq.s32.totalorder %s23, 0
      %p86 = por %p84, %p85
      %p87 = scmp.ne.s32.totalorder %s75, %s76
      %p88 = scmp.eq.s32.totalorder %s24, 1
      %p89 = por %p87, %p88
      %p91 = scmp.ne.s32.totalorder %s76, %s90
      %p92 = scmp.eq.s32.totalorder %s24, 0
      %p93 = por %p91, %p92
      %s95 = sadd.s32 %s94, 1
      %p98 = scmp.eq.s32.totalorder %s18, 1
      %p99 = scmp.ne.s32.totalorder %s94, %s96
      %p100 = scmp.eq.s32.totalorder %s18, 0
      %p101 = por %p99, %p100
      %p102 = scmp.ne.s32.totalorder %s94, %s96
      %p103 = scmp.eq.s32.totalorder %s23, 1
      %p104 = por %p102, %p103
      %p105 = scmp.ne.s32.totalorder %s96, %s97
      %p106 = scmp.eq.s32.totalorder %s23, 0
      %p107 = por %p105, %p106
      %p108 = scmp.ne.s32.totalorder %s96, %s97
      %p109 = scmp.eq.s32.totalorder %s24, 1
      %p110 = por %p108, %p109
      %p112 = scmp.ne.s32.totalorder %s97, %s111
      %p113 = scmp.eq.s32.totalorder %s24, 0
      %p114 = por %p112, %p113
      %s115 = ssub.s32 %s18, %s25
      %p116 = scmp.eq.s32.totalorder %s115, 0
      %s118 = sadd.s32 %s117, 1
      %s119 = scalar_select %p116, %s117, %s118
      %p122 = pneg %p116
      %p123 = scmp.eq.s32.totalorder %s18, 1
      %p124 = por %p122, %p123
      %p125 = scmp.ne.s32.totalorder %s117, %s120
      %p126 = scmp.eq.s32.totalorder %s18, 0
      %p127 = por %p125, %p126
      %p128 = scmp.ne.s32.totalorder %s117, %s120
      %p129 = scmp.eq.s32.totalorder %s23, 1
      %p130 = por %p128, %p129
      %p131 = scmp.ne.s32.totalorder %s120, %s121
      %p132 = scmp.eq.s32.totalorder %s23, 0
      %p133 = por %p131, %p132
      %p134 = scmp.ne.s32.totalorder %s120, %s121
      %p135 = scmp.eq.s32.totalorder %s24, 1
      %p136 = por %p134, %p135
      %p138 = scmp.ne.s32.totalorder %s121, %s137
      %p139 = scmp.eq.s32.totalorder %s24, 0
      %p140 = por %p138, %p139
      %p141 = scmp.le.s32.totalorder 1, %s18
      %p142 = scmp.lt.s32.totalorder %s18, 3
      %p143 = pnand %p141, %p142
      %p144 = pneg %p143
      // Predicated region
      $region9: #{tpu_custom_call.1} parent=5 // pred_check
        _
      $region10: #{tpu_custom_call.1} parent=5 // pred_check_branch
        %146 = sbr.rel (%p143) target = $region12
      $region11: #{tpu_custom_call.1} parent=5 // pred_region
        %s147 = ssub.s32 %s18, 1
        // Predicated region
        $region13: #{tpu_custom_call.1} parent=11 // pred_check
          %p148 = pneg %p65
        $region14: #{tpu_custom_call.1} parent=11 // pred_check_branch
          %150 = sbr.rel (%p148) target = $region16
        $region15: #{tpu_custom_call.1} parent=11 // pred_region
          %152 = vsyncadd [#allocation6], 0
          %s153 = sshll.u32 %s1, 4
          %s154 = int_to_ptr.hbm [resolvable:$true] %s153
          %s155 = sshll.u32 [#allocation5], 4
          %s156 = int_to_ptr.vmem [resolvable:$true] %s155
          %161 = dma.hbm_to_vmem [thread:$0]  %s154, 128, %s156, [#allocation6], 64, 64, 4
        $region16: #{tpu_custom_call.1} parent=11 // pred_fallthru
          _
        // Predicated region
        $region17: #{tpu_custom_call.1} parent=11 // pred_check
          %p162 = pneg %p86
        $region18: #{tpu_custom_call.1} parent=11 // pred_check_branch
          %164 = sbr.rel (%p162) target = $region20
        $region19: #{tpu_custom_call.1} parent=11 // pred_region
          %166 = vsyncadd [#allocation6], 0
          %s167 = sshll.u32 %s2, 4
          %s168 = int_to_ptr.hbm [resolvable:$true] %s167
          %s169 = sshll.u32 [#allocation7], 4
          %s170 = int_to_ptr.vmem [resolvable:$true] %s169
          %175 = dma.hbm_to_vmem [thread:$0]  %s168, 1024, %s170, [#allocation6], 64, 64, 4
        $region20: #{tpu_custom_call.1} parent=11 // pred_fallthru
          _
        // Predicated region
        $region21: #{tpu_custom_call.1} parent=11 // pred_check
          %p176 = pneg %p107
        $region22: #{tpu_custom_call.1} parent=11 // pred_check_branch
          %178 = sbr.rel (%p176) target = $region24
        $region23: #{tpu_custom_call.1} parent=11 // pred_region
          %180 = vsyncadd [#allocation9], 0
          %s182 = sshll.u32 %s3, 4
          %s183 = int_to_ptr.hbm [resolvable:$true] %s182
          %s184 = sshll.u32 [#allocation8], 4
          %s185 = int_to_ptr.vmem [resolvable:$true] %s184
          %187 = dma.hbm_to_vmem [thread:$0]  %s183, 64, %s185, [#allocation9]
        $region24: #{tpu_custom_call.1} parent=11 // pred_fallthru
          _
      $region12: #{tpu_custom_call.1} parent=5 // pred_fallthru
        _
      %p188 = scmp.lt.s32.totalorder %s18, 2
      // Predicated region
      $region25: #{tpu_custom_call.1} parent=5 // pred_check
        %p189 = pneg %p188
      $region26: #{tpu_custom_call.1} parent=5 // pred_check_branch
        %191 = sbr.rel (%p189) target = $region28
      $region27: #{tpu_custom_call.1} parent=5 // pred_region
        // Predicated region
        $region29: #{tpu_custom_call.1} parent=27 // pred_check
          %p192 = pneg %p38
        $region30: #{tpu_custom_call.1} parent=27 // pred_check_branch
          %194 = sbr.rel (%p192) target = $region32
        $region31: #{tpu_custom_call.1} parent=27 // pred_region
          %s195 = sand.u32 %s28, 1
          %s196 = scalar_lea.sflag [#allocation3], %s195
          %s197 = sand.u32 %s28, 1
          %s198 = smul.addr %s197, 8
          %s199 = scalar_lea.vmem [#allocation2], %s198
          %201 = vsyncadd %s196, 0
          %s202 = smul.addr %s18, 8
          %s203 = scalar_lea.hbm %s0, %s202
          %s205 = sshll.u32 %s203, 4
          %s206 = int_to_ptr.hbm [resolvable:$true] %s205
          %s207 = sshll.u32 %s199, 4
          %s208 = int_to_ptr.vmem [resolvable:$true] %s207
          %210 = dma.hbm_to_vmem [thread:$0]  %s206, 128, %s208, %s196
        $region32: #{tpu_custom_call.1} parent=27 // pred_fallthru
          _
      $region28: #{tpu_custom_call.1} parent=5 // pred_fallthru
        _
      %p211 = scmp.le.s32.totalorder 1, %s18
      %p212 = scmp.lt.s32.totalorder %s18, 3
      %p213 = pnand %p211, %p212
      %p214 = pneg %p213
      // Predicated region
      $region33: #{tpu_custom_call.1} parent=5 // pred_check
        _
      $region34: #{tpu_custom_call.1} parent=5 // pred_check_branch
        %216 = sbr.rel (%p213) target = $region36
      $region35: #{tpu_custom_call.1} parent=5 // pred_region
        %s217 = ssub.s32 %s18, 1
        %s218 = sand.u32 %s31, 1
        %s219 = scalar_lea.sflag [#allocation3], %s218
        %s220 = sand.u32 %s31, 1
        %s221 = smul.addr %s220, 8
        %s222 = scalar_lea.vmem [#allocation2], %s221
        // Predicated region
        $region37: #{tpu_custom_call.1} parent=35 // pred_check
          %p223 = pneg %p44
        $region38: #{tpu_custom_call.1} parent=35 // pred_check_branch
          %225 = sbr.rel (%p223) target = $region40
        $region39: #{tpu_custom_call.1} parent=35 // pred_region
          %227 = dma.done %s219, 128
        $region40: #{tpu_custom_call.1} parent=35 // pred_fallthru
          _
        // Predicated region
        $region41: #{tpu_custom_call.1} parent=35 // pred_check
          %p228 = pneg %p65
        $region42: #{tpu_custom_call.1} parent=35 // pred_check_branch
          %230 = sbr.rel (%p228) target = $region44
        $region43: #{tpu_custom_call.1} parent=35 // pred_region
          %232 = dma.done [#allocation6], 128
        $region44: #{tpu_custom_call.1} parent=35 // pred_fallthru
          _
        // Predicated region
        $region45: #{tpu_custom_call.1} parent=35 // pred_check
          %p233 = pneg %p86
        $region46: #{tpu_custom_call.1} parent=35 // pred_check_branch
          %235 = sbr.rel (%p233) target = $region48
        $region47: #{tpu_custom_call.1} parent=35 // pred_region
          %237 = dma.done [#allocation6], 1024
        $region48: #{tpu_custom_call.1} parent=35 // pred_fallthru
          _
        // Predicated region
        $region49: #{tpu_custom_call.1} parent=35 // pred_check
          %p238 = pneg %p107
        $region50: #{tpu_custom_call.1} parent=35 // pred_check_branch
          %240 = sbr.rel (%p238) target = $region52
        $region51: #{tpu_custom_call.1} parent=35 // pred_region
          %242 = dma.done [#allocation9], 64
        $region52: #{tpu_custom_call.1} parent=35 // pred_fallthru
          _
        %s243 = sand.u32 %s31, 1
        %s244 = scalar_lea.sflag [#allocation3], %s243
        %s245 = sand.u32 %s31, 1
        %s246 = smul.addr %s245, 8
        %s247 = scalar_lea.vmem [#allocation2], %s246
        %p248 = pneg %p44
        %p249 = pneg %p41
        %p250 = pneg %p65
        %p251 = pneg %p62
        %p252 = pneg %p86
        %p253 = pneg %p83
        %p254 = pneg %p107
        %p255 = pneg %p104
        %p256 = pneg %p133
        %p257 = pneg %p130
        %s258 = sand.u32 %s120, 1
        %s259 = scalar_lea.sflag [#allocation4], %s258
        %s260 = sand.u32 %s120, 1
        %s261 = smul.addr %s260, 8
        %s262 = scalar_lea.vmem [#allocation10], %s261
        %v264 = vld [vmem:[%s222] sm:$0xff]
        %v265 = vpack.c.bf16 %v264, %v264
        %v266 = vld [vmem:[#allocation8] sm:$0x1]
        %v267 = vld [vmem:[#allocation8 + $0x1] sm:$0x1]
        %v268 = vld [vmem:[#allocation8 + $0x2] sm:$0x1]
        %v269 = vld [vmem:[#allocation8 + $0x3] sm:$0x1]
        %v270 = vld [vmem:[#allocation5] sm:$0xf]
        %v271 = vld [vmem:[#allocation5 + $0x4] sm:$0xf]
        %v272 = vperm.slane %v266, 0
        %v275 = vunpack.c.l.b16 %v270
        %v276 = vunpack.c.l.b16 %v271
        %v277 = vpack.c.b16 %v276, %v275
        %vm279 = vcmask 130048
        %v281 = vsel %vm279, %v265, 0
        %283 = vmatpush.bf16.msra.mxu0 0
        %284 = vmatpush.bf16.msra.mxu0 0
        %285 = vmatpush.bf16.msra.mxu0 0
        %286 = vmatpush.bf16.msra.mxu0 0
        %287 = vmatpush.bf16.msra.mxu0 0
        %288 = vmatpush.bf16.msra.mxu0 0
        %289 = vmatpush.bf16.msra.mxu0 0
        %290 = vmatpush.bf16.msra.mxu0 %v277
        %291 = vmatmul.bf16.gmra.mxu0 %v281
        %v292 = vpop.f32.mrf.mxu0
        %v293 = vadd.f32 %v272, %v292
        %v294 = vpop.f32.mrf.mxu0
        %295 = vdwg.mxu0
        %v296 = vmax.f32 %v293, 0.0
        %v297 = vpack.c.bf16 %v296, %v296
        %v298 = vld [vmem:[#allocation7] sm:$0xf]
        %v299 = vld [vmem:[#allocation7 + $0x4] sm:$0xf]
        %v300 = vld [vmem:[#allocation7 + $0x8] sm:$0xf]
        %v301 = vld [vmem:[#allocation7 + $0xc] sm:$0xf]
        %v302 = vld [vmem:[#allocation7 + $0x10] sm:$0xf]
        %v303 = vld [vmem:[#allocation7 + $0x14] sm:$0xf]
        %v304 = vld [vmem:[#allocation7 + $0x18] sm:$0xf]
        %v305 = vld [vmem:[#allocation7 + $0x1c] sm:$0xf]
        %v306 = vld [vmem:[#allocation7 + $0x20] sm:$0xf]
        %v307 = vld [vmem:[#allocation7 + $0x24] sm:$0xf]
        %v308 = vld [vmem:[#allocation7 + $0x28] sm:$0xf]
        %v309 = vld [vmem:[#allocation7 + $0x2c] sm:$0xf]
        %v310 = vld [vmem:[#allocation7 + $0x30] sm:$0xf]
        %v311 = vld [vmem:[#allocation7 + $0x34] sm:$0xf]
        %v312 = vld [vmem:[#allocation7 + $0x38] sm:$0xf]
        %v313 = vld [vmem:[#allocation7 + $0x3c] sm:$0xf]
        %v314 = vperm.slane %v267, 0
        %v331 = vunpack.c.l.b16 %v298
        %v332 = vunpack.c.l.b16 %v299
        %v333 = vunpack.c.l.b16 %v300
        %v334 = vunpack.c.l.b16 %v301
        %v335 = vunpack.c.l.b16 %v302
        %v336 = vunpack.c.l.b16 %v303
        %v337 = vunpack.c.l.b16 %v304
        %v338 = vunpack.c.l.b16 %v305
        %v339 = vunpack.c.l.b16 %v306
        %v340 = vunpack.c.l.b16 %v307
        %v341 = vunpack.c.l.b16 %v308
        %v342 = vunpack.c.l.b16 %v309
        %v343 = vunpack.c.l.b16 %v310
        %v344 = vunpack.c.l.b16 %v311
        %v345 = vunpack.c.l.b16 %v312
        %v346 = vunpack.c.l.b16 %v313
        %v347 = vpack.c.b16 %v332, %v331
        %v348 = vpack.c.b16 %v334, %v333
        %v349 = vpack.c.b16 %v336, %v335
        %v350 = vpack.c.b16 %v338, %v337
        %v351 = vpack.c.b16 %v340, %v339
        %v352 = vpack.c.b16 %v342, %v341
        %v353 = vpack.c.b16 %v344, %v343
        %v354 = vpack.c.b16 %v346, %v345
        %363 = vmatpush.bf16.msra.mxu0 %v354
        %364 = vmatpush.bf16.msra.mxu0 %v353
        %365 = vmatpush.bf16.msra.mxu0 %v352
        %366 = vmatpush.bf16.msra.mxu0 %v351
        %367 = vmatpush.bf16.msra.mxu0 %v350
        %368 = vmatpush.bf16.msra.mxu0 %v349
        %369 = vmatpush.bf16.msra.mxu0 %v348
        %370 = vmatpush.bf16.msra.mxu0 %v347
        %371 = vmatmul.bf16.gmra.mxu0 %v297
        %v372 = vpop.f32.mrf.mxu0
        %v373 = vadd.f32 %v314, %v372
        %v374 = vpop.f32.mrf.mxu0
        %375 = vdwg.mxu0
        %376 = vadd.xlane.f32.xlu0 %v373
        %v377 = vpop.xlane.xlu0 %376
        %v378 = vmul.f32 %v377, 0.03125
        %v379 = vmul.f32 %v373, %v373
        %380 = vadd.xlane.f32.xlu0 %v379
        %v381 = vpop.xlane.xlu0 %380
        %v382 = vmul.f32 %v381, 0.03125
        %v383 = vmul.f32 %v378, %v378
        %v384 = vsub.f32 %v382, %v383
        %v385 = vmax.f32 %v384, 0.0
        %v386 = vsub.f32 %v373, %v378
        %v387 = vadd.f32 %v385, 1e-05
        %v388 = vrsqrt.pop %v387
        %v389 = vmul.f32 %v388, %v387
        %v390 = vmul.f32 %v389, %v388
        %v391 = vmul.f32 0.5, %v390
        %v392 = vsub.f32 1.5, %v391
        %v393 = vmul.f32 %v388, %v392
        %vm394 = vweird.f32 %v387
        %vm395 = vweird.f32 %v388
        %vm396 = vmor %vm394, %vm395
        %v397 = vsel %vm396, %v388, %v393
        %v398 = vmul.f32 %v386, %v397
        %v399 = vperm.slane %v268, 0
        %v400 = vmul.f32 %v398, %v399
        %v401 = vperm.slane %v269, 0
        %v402 = vadd.f32 %v400, %v401
        %v403 = vmax.f32 %v402, 0.0
        %vm404 = vcmask 261120
        %405 = vst.msk [vmem:[%s262] sm:$0xff] %vm404, %v403
        %s406 = sand.u32 %s120, 1
        %s407 = scalar_lea.sflag [#allocation4], %s406
        %s408 = sand.u32 %s120, 1
        %s409 = smul.addr %s408, 8
        %s410 = scalar_lea.vmem [#allocation10], %s409
        // Predicated region
        $region53: #{tpu_custom_call.1} parent=35 // pred_check
          %p411 = pneg %p130
        $region54: #{tpu_custom_call.1} parent=35 // pred_check_branch
          %413 = sbr.rel (%p411) target = $region56
        $region55: #{tpu_custom_call.1} parent=35 // pred_region
          %415 = vsyncadd %s407, 0
          %s416 = smul.addr %s23, 8
          %s417 = scalar_lea.hbm %s4, %s416
          %s419 = sshll.u32 %s410, 4
          %s420 = int_to_ptr.vmem [resolvable:$true] %s419
          %s421 = sshll.u32 %s417, 4
          %s422 = int_to_ptr.hbm [resolvable:$true] %s421
          %424 = dma.vmem_to_hbm [thread:$0]  %s420, 128, %s422, %s407
        $region56: #{tpu_custom_call.1} parent=35 // pred_fallthru
          _
      $region36: #{tpu_custom_call.1} parent=5 // pred_fallthru
        _
      %p425 = scmp.le.s32.totalorder 2, %s18
      // Predicated region
      $region57: #{tpu_custom_call.1} parent=5 // pred_check
        %p426 = pneg %p425
      $region58: #{tpu_custom_call.1} parent=5 // pred_check_branch
        %428 = sbr.rel (%p426) target = $region60
      $region59: #{tpu_custom_call.1} parent=5 // pred_region
        %s429 = ssub.s32 %s18, 2
        // Predicated region
        $region61: #{tpu_custom_call.1} parent=59 // pred_check
          %p430 = pneg %p136
        $region62: #{tpu_custom_call.1} parent=59 // pred_check_branch
          %432 = sbr.rel (%p430) target = $region64
        $region63: #{tpu_custom_call.1} parent=59 // pred_region
          %s433 = sand.u32 %s121, 1
          %s434 = scalar_lea.sflag [#allocation4], %s433
          %s435 = sand.u32 %s121, 1
          %s436 = smul.addr %s435, 8
          %s437 = scalar_lea.vmem [#allocation10], %s436
          %439 = dma.done %s434, 128
        $region64: #{tpu_custom_call.1} parent=59 // pred_fallthru
          _
      $region60: #{tpu_custom_call.1} parent=5 // pred_fallthru
        _
    $region6: #{tpu_custom_call.1} parent=1 // loop_footer
      %s22 = sadd.s32 1, %s18
    $region7: #{tpu_custom_call.1} parent=1 // loop_footer_branch
      %17 = sbr.rel target = $region3
    $region8: #{tpu_custom_call.1} parent=1 // loop_exit
      _
    %440 = vsyncpa [#allocation3], 1
    %s441 = scalar_lea.sflag [#allocation3], 1
    %442 = vsyncpa %s441, 1
    %443 = vsyncpa [#allocation6], 1
    %444 = vsyncpa [#allocation9], 1
    %445 = vsyncpa [#allocation4], 1
    %s446 = scalar_lea.sflag [#allocation4], 1
    %447 = vsyncpa %s446, 1

</llo_original>
